<compile_context>
chip_gen: v7x
topology: tpu7x:2x2x1
jax: 0.10.0
libtpu: 0.0.40
codegen_flags: <defaults>
</compile_context>

<pallas_src>
from functools import partial
from typing import Optional, Tuple, Union

import jax
import jax.numpy as jnp
from jax.experimental import pallas as pl
from jax.experimental.pallas import tpu as pltpu


# -----------------------------------------------------------------------------
# Fused Pallas kernel: split + coupling (linear) + scaling + affine + concat
# -----------------------------------------------------------------------------
def _affine_coupling_kernel(
    x_ref,       # (Bt, F)     input rows
    ws_ref,      # (d1, d2)    coupling weight for log_s
    bs_ref,      # (1, d2)     coupling bias   for log_s
    wt_ref,      # (d1, d2)    coupling weight for t
    bt_ref,      # (1, d2)     coupling bias   for t
    sf_ref,      # (1, d2)     scaling_factor (per-channel)
    y_ref,       # (Bt, F)     output rows
    ls_sum_ref,  # (Bt, 1)     per-row sum of log_s (logdet contribution)
    *,
    d1: int,
    use_scaling: bool,
    reverse: bool,
):
    x = x_ref[...].astype(jnp.float32)
    x1 = x[:, :d1]          # first half  (lane-aligned static slice; no copy pass)
    x2 = x[:, d1:]          # second half

    # coupling network: linear -> (log_s, t)
    log_s = jnp.dot(x1, ws_ref[...], preferred_element_type=jnp.float32) + bs_ref[...]
    t = jnp.dot(x1, wt_ref[...], preferred_element_type=jnp.float32) + bt_ref[...]

    if use_scaling:
        scale = jnp.exp(sf_ref[...])
        log_s = jnp.tanh(log_s / scale) * scale

    if reverse:
        x2_out = (x2 - t) * jnp.exp(-log_s)
    else:
        x2_out = x2 * jnp.exp(log_s) + t

    # concat happens by writing directly into the channel slabs of the output
    y_ref[:, :d1] = x1.astype(y_ref.dtype)
    y_ref[:, d1:] = x2_out.astype(y_ref.dtype)

    ls_sum_ref[...] = jnp.sum(log_s, axis=-1, keepdims=True)


# -----------------------------------------------------------------------------
# pallas_call wrapper
# -----------------------------------------------------------------------------
def _affine_coupling_call(
    x: jax.Array,
    w_s: jax.Array,
    b_s: jax.Array,
    w_t: jax.Array,
    b_t: jax.Array,
    scaling_factor: Optional[jax.Array],
    *,
    reverse: bool,
    block_rows: int = 8,
) -> Tuple[jax.Array, jax.Array]:
    B, F = x.shape
    d1 = F // 2
    d2 = F - d1
    assert B % block_rows == 0, "batch must be divisible by block_rows (demo constraint)"

    use_scaling = scaling_factor is not None
    if scaling_factor is None:
        sf2d = jnp.zeros((1, d2), dtype=jnp.float32)
    else:
        sf2d = jnp.broadcast_to(
            scaling_factor.astype(jnp.float32).reshape(1, -1), (1, d2)
        )
    bs2d = b_s.reshape(1, d2).astype(jnp.float32)
    bt2d = b_t.reshape(1, d2).astype(jnp.float32)

    grid = (B // block_rows,)

    y, ls_sum = pl.pallas_call(
        partial(
            _affine_coupling_kernel,
            d1=d1,
            use_scaling=use_scaling,
            reverse=reverse,
        ),
        grid=grid,
        in_specs=[
            pl.BlockSpec((block_rows, F), lambda i: (i, 0)),   # x (lane-dense, 256 wide)
            pl.BlockSpec((d1, d2), lambda i: (0, 0)),          # W_s (resident)
            pl.BlockSpec((1, d2), lambda i: (0, 0)),           # b_s
            pl.BlockSpec((d1, d2), lambda i: (0, 0)),          # W_t (resident)
            pl.BlockSpec((1, d2), lambda i: (0, 0)),           # b_t
            pl.BlockSpec((1, d2), lambda i: (0, 0)),           # scaling_factor
        ],
        out_specs=(
            pl.BlockSpec((block_rows, F), lambda i: (i, 0)),   # y (full-width stores)
            pl.BlockSpec((block_rows, 1), lambda i: (i, 0)),   # per-row sum(log_s)
        ),
        out_shape=(
            jax.ShapeDtypeStruct((B, F), x.dtype),
            jax.ShapeDtypeStruct((B, 1), jnp.float32),
        ),
        compiler_params=pltpu.CompilerParams(
            dimension_semantics=("parallel",),
        ),
    )(x, w_s.astype(jnp.float32), bs2d, w_t.astype(jnp.float32), bt2d, sf2d)

    return y, ls_sum[:, 0]


# -----------------------------------------------------------------------------
# Module-equivalent wrapper
# -----------------------------------------------------------------------------
class AffineCoupling:
    """JAX/Pallas equivalent of audyn's AffineCoupling.

    The coupling network is a fused linear layer x1 -> (log_s, t).
    # TODO(synk): the PyTorch module accepts an arbitrary `coupling` nn.Module
    # (and optional split/concat modules); only the default split/concat and a
    # linear coupling are implemented here.
    """

    def __init__(
        self,
        num_features: int,
        scaling: bool = False,
        scaling_channels: Optional[int] = None,
        *,
        key: jax.Array,
    ) -> None:
        d1 = num_features // 2
        d2 = num_features - d1
        self.num_features = num_features
        self.d1, self.d2 = d1, d2

        k1, k2 = jax.random.split(key)
        # small init keeps exp(log_s) well-conditioned for the demo
        self.w_s = 0.1 * jax.random.normal(k1, (d1, d2), dtype=jnp.float32)
        self.b_s = jnp.zeros((d2,), dtype=jnp.float32)
        self.w_t = 0.1 * jax.random.normal(k2, (d1, d2), dtype=jnp.float32)
        self.b_t = jnp.zeros((d2,), dtype=jnp.float32)

        if scaling:
            n = scaling_channels if scaling_channels is not None else 1
            # PyTorch resets scaling_factor to zero
            self.scaling_factor = jnp.zeros((n,), dtype=jnp.float32)
        else:
            self.scaling_factor = None

    @staticmethod
    def _initialize_logdet_if_necessary(logdet, dtype=jnp.float32):
        if isinstance(logdet, (int, float)):
            logdet = jnp.full((), logdet, dtype=dtype)
        return logdet

    def __call__(
        self,
        input: jax.Array,
        logdet: Optional[Union[jax.Array, int, float]] = None,
        reverse: bool = False,
    ):
        assert input.ndim == 2, (
            f"'input' is expected to be 2-D tensor, but given {input.ndim}-D tensor."
        )
        logdet = self._initialize_logdet_if_necessary(logdet, dtype=jnp.float32)

        output, ls_sum = _affine_coupling_call(
            input,
            self.w_s,
            self.b_s,
            self.w_t,
            self.b_t,
            self.scaling_factor,
            reverse=reverse,
        )

        if logdet is None:
            return output
        if reverse:
            logdet = logdet - ls_sum
        else:
            logdet = logdet + ls_sum
        return output, logdet


# -----------------------------------------------------------------------------
# Pure-JAX reference for correctness checking
# -----------------------------------------------------------------------------
def _reference(x, w_s, b_s, w_t, b_t, sf, reverse):
    d1 = x.shape[-1] // 2
    x1, x2 = x[:, :d1], x[:, d1:]
    log_s = x1 @ w_s + b_s
    t = x1 @ w_t + b_t
    if sf is not None:
        scale = jnp.exp(jnp.broadcast_to(sf.reshape(1, -1), log_s.shape))
        log_s = jnp.tanh(log_s / scale) * scale
    if reverse:
        x2o = (x2 - t) * jnp.exp(-log_s)
    else:
        x2o = x2 * jnp.exp(log_s) + t
    return jnp.concatenate([x1, x2o], axis=-1), jnp.sum(log_s, axis=-1)


# -----------------------------------------------------------------------------
# Demo / smoke test
# -----------------------------------------------------------------------------
if __name__ == "__main__":
    key = jax.random.PRNGKey(0)
    k_x, k_mod = jax.random.split(key)

    B, F = 16, 256  # 2-D input [batch, num_features]; F split into 128 + 128
    x = jax.random.normal(k_x, (B, F), dtype=jnp.float32)

    flow = AffineCoupling(F, scaling=True, scaling_channels=F - F // 2, key=k_mod)

    # ---- forward ----
    y, logdet = flow(x, logdet=0.0, reverse=False)
    y = jax.block_until_ready(y)
    logdet = jax.block_until_ready(logdet)

    y_ref, ls_ref = _reference(
        x, flow.w_s, flow.b_s, flow.w_t, flow.b_t, flow.scaling_factor, reverse=False
    )
    assert y.shape == (B, F) and logdet.shape == (B,)
    assert jnp.allclose(y, y_ref, rtol=1e-5, atol=1e-5), "forward output mismatch"
    assert jnp.allclose(logdet, ls_ref, rtol=1e-5, atol=1e-5), "forward logdet mismatch"

    # ---- reverse (must invert forward, logdet must cancel) ----
    x_rec, logdet_rt = flow(y, logdet=logdet, reverse=True)
    x_rec = jax.block_until_ready(x_rec)
    logdet_rt = jax.block_until_ready(logdet_rt)

    assert jnp.allclose(x_rec, x, rtol=1e-5, atol=1e-5), "reverse does not invert forward"
    assert jnp.allclose(logdet_rt, jnp.zeros((B,)), atol=1e-4), "logdet did not cancel"

    # ---- logdet=None path ----
    y_only = flow(x, logdet=None, reverse=False)
    y_only = jax.block_until_ready(y_only)
    assert jnp.allclose(y_only, y_ref, rtol=1e-5, atol=1e-5)

    print("KERNEL_OK")
</pallas_src>

<mosaic_0001>
module attributes {stable_mosaic.version = 11 : i64} {
  func.func @_affine_coupling_kernel(%arg0: i32, %arg1: memref<8x256xf32, #tpu.memory_space<vmem>>, %arg2: memref<128x128xf32, #tpu.memory_space<vmem>>, %arg3: memref<1x128xf32, #tpu.memory_space<vmem>>, %arg4: memref<128x128xf32, #tpu.memory_space<vmem>>, %arg5: memref<1x128xf32, #tpu.memory_space<vmem>>, %arg6: memref<1x128xf32, #tpu.memory_space<vmem>>, %arg7: memref<8x256xf32, #tpu.memory_space<vmem>>, %arg8: memref<8x1xf32, #tpu.memory_space<vmem>>) attributes {dimension_semantics = [#tpu.dimension_semantics<parallel>], iteration_bounds = array<i64: 2>, scalar_prefetch = 0 : i64, scratch_operands = 0 : i64, tpu.core_type = #tpu.core_type<tc>, window_params = [{transform_indices = @transform_0, window_bounds = array<i64: 8, 256>}, {pipeline_mode = #tpu.pipeline_mode<synchronous>, transform_indices = @transform_1, window_bounds = array<i64: 128, 128>}, {pipeline_mode = #tpu.pipeline_mode<synchronous>, transform_indices = @transform_2, window_bounds = array<i64: 1, 128>}, {pipeline_mode = #tpu.pipeline_mode<synchronous>, transform_indices = @transform_3, window_bounds = array<i64: 128, 128>}, {pipeline_mode = #tpu.pipeline_mode<synchronous>, transform_indices = @transform_4, window_bounds = array<i64: 1, 128>}, {pipeline_mode = #tpu.pipeline_mode<synchronous>, transform_indices = @transform_5, window_bounds = array<i64: 1, 128>}, {transform_indices = @transform_6, window_bounds = array<i64: 8, 256>}, {transform_indices = @transform_7, window_bounds = array<i64: 8, 1>}]} {
    %c0 = arith.constant 0 : index
    %c0_0 = arith.constant 0 : index
    %0 = vector.load %arg1[%c0, %c0_0] : memref<8x256xf32, #tpu.memory_space<vmem>>, vector<8x256xf32>
    %1 = vector.extract_strided_slice %0 {offsets = [0, 0], sizes = [8, 128], strides = [1, 1]} : vector<8x256xf32> to vector<8x128xf32>
    %2 = vector.extract_strided_slice %0 {offsets = [0, 128], sizes = [8, 128], strides = [1, 1]} : vector<8x256xf32> to vector<8x128xf32>
    %c0_1 = arith.constant 0 : index
    %c0_2 = arith.constant 0 : index
    %3 = vector.load %arg2[%c0_1, %c0_2] : memref<128x128xf32, #tpu.memory_space<vmem>>, vector<128x128xf32>
    %cst = arith.constant dense<0.000000e+00> : vector<8x128xf32>
    %4 = tpu.matmul %1, %3, %cst {dimension_numbers = #tpu.dot_dimension_numbers<[1], [0], [0], [1], [0, 0, 1, 1], [], []>} : vector<8x128xf32>, vector<128x128xf32>, vector<8x128xf32> -> vector<8x128xf32>
    %c0_3 = arith.constant 0 : index
    %c0_4 = arith.constant 0 : index
    %5 = vector.load %arg3[%c0_3, %c0_4] : memref<1x128xf32, #tpu.memory_space<vmem>>, vector<1x128xf32>
    %6 = vector.broadcast %5 : vector<1x128xf32> to vector<8x128xf32>
    %7 = arith.addf %4, %6 : vector<8x128xf32>
    %c0_5 = arith.constant 0 : index
    %c0_6 = arith.constant 0 : index
    %8 = vector.load %arg4[%c0_5, %c0_6] : memref<128x128xf32, #tpu.memory_space<vmem>>, vector<128x128xf32>
    %cst_7 = arith.constant dense<0.000000e+00> : vector<8x128xf32>
    %9 = tpu.matmul %1, %8, %cst_7 {dimension_numbers = #tpu.dot_dimension_numbers<[1], [0], [0], [1], [0, 0, 1, 1], [], []>} : vector<8x128xf32>, vector<128x128xf32>, vector<8x128xf32> -> vector<8x128xf32>
    %c0_8 = arith.constant 0 : index
    %c0_9 = arith.constant 0 : index
    %10 = vector.load %arg5[%c0_8, %c0_9] : memref<1x128xf32, #tpu.memory_space<vmem>>, vector<1x128xf32>
    %11 = vector.broadcast %10 : vector<1x128xf32> to vector<8x128xf32>
    %12 = arith.addf %9, %11 : vector<8x128xf32>
    %c0_10 = arith.constant 0 : index
    %c0_11 = arith.constant 0 : index
    %13 = vector.load %arg6[%c0_10, %c0_11] : memref<1x128xf32, #tpu.memory_space<vmem>>, vector<1x128xf32>
    %14 = math.exp %13 : vector<1x128xf32>
    %15 = vector.broadcast %14 : vector<1x128xf32> to vector<8x128xf32>
    %16 = arith.divf %7, %15 : vector<8x128xf32>
    %17 = math.tanh %16 : vector<8x128xf32>
    %18 = vector.broadcast %14 : vector<1x128xf32> to vector<8x128xf32>
    %19 = arith.mulf %17, %18 : vector<8x128xf32>
    %20 = math.exp %19 : vector<8x128xf32>
    %21 = arith.mulf %2, %20 : vector<8x128xf32>
    %22 = arith.addf %21, %12 : vector<8x128xf32>
    %c0_12 = arith.constant 0 : index
    %c0_13 = arith.constant 0 : index
    %23 = vector.load %arg7[%c0_12, %c0_13] : memref<8x256xf32, #tpu.memory_space<vmem>>, vector<8x128xf32>
    tpu.vector_store %arg7[%c0_12, %c0_13], %1 {strides = array<i32>} : memref<8x256xf32, #tpu.memory_space<vmem>>, vector<8x128xf32>,
    %c0_14 = arith.constant 0 : index
    %c128 = arith.constant 128 : index
    %24 = vector.load %arg7[%c0_14, %c128] : memref<8x256xf32, #tpu.memory_space<vmem>>, vector<8x128xf32>
    tpu.vector_store %arg7[%c0_14, %c128], %22 {strides = array<i32>} : memref<8x256xf32, #tpu.memory_space<vmem>>, vector<8x128xf32>,
    %cst_15 = arith.constant dense<0.000000e+00> : vector<8xf32>
    %25 = vector.multi_reduction <add>, %19, %cst_15 [1] : vector<8x128xf32> to vector<8xf32>
    %26 = vector.shape_cast %25 : vector<8xf32> to vector<8x1xf32>
    %c0_16 = arith.constant 0 : index
    %c0_17 = arith.constant 0 : index
    %27 = vector.load %arg8[%c0_16, %c0_17] : memref<8x1xf32, #tpu.memory_space<vmem>>, vector<8x1xf32>
    tpu.vector_store %arg8[%c0_16, %c0_17], %26 {strides = array<i32>} : memref<8x1xf32, #tpu.memory_space<vmem>>, vector<8x1xf32>,
    return
  }
  func.func @transform_0(%arg0: i32) -> (i32, i32) {
    %c0_i32 = arith.constant 0 : i32
    %c0_i32_0 = arith.constant 0 : i32
    return %arg0, %c0_i32 : i32, i32
  }
  func.func @transform_1(%arg0: i32) -> (i32, i32) {
    %c0_i32 = arith.constant 0 : i32
    %c0_i32_0 = arith.constant 0 : i32
    %c0_i32_1 = arith.constant 0 : i32
    return %c0_i32, %c0_i32_0 : i32, i32
  }
  func.func @transform_2(%arg0: i32) -> (i32, i32) {
    %c0_i32 = arith.constant 0 : i32
    %c0_i32_0 = arith.constant 0 : i32
    %c0_i32_1 = arith.constant 0 : i32
    return %c0_i32, %c0_i32_0 : i32, i32
  }
  func.func @transform_3(%arg0: i32) -> (i32, i32) {
    %c0_i32 = arith.constant 0 : i32
    %c0_i32_0 = arith.constant 0 : i32
    %c0_i32_1 = arith.constant 0 : i32
    return %c0_i32, %c0_i32_0 : i32, i32
  }
  func.func @transform_4(%arg0: i32) -> (i32, i32) {
    %c0_i32 = arith.constant 0 : i32
    %c0_i32_0 = arith.constant 0 : i32
    %c0_i32_1 = arith.constant 0 : i32
    return %c0_i32, %c0_i32_0 : i32, i32
  }
  func.func @transform_5(%arg0: i32) -> (i32, i32) {
    %c0_i32 = arith.constant 0 : i32
    %c0_i32_0 = arith.constant 0 : i32
    %c0_i32_1 = arith.constant 0 : i32
    return %c0_i32, %c0_i32_0 : i32, i32
  }
  func.func @transform_6(%arg0: i32) -> (i32, i32) {
    %c0_i32 = arith.constant 0 : i32
    %c0_i32_0 = arith.constant 0 : i32
    return %arg0, %c0_i32 : i32, i32
  }
  func.func @transform_7(%arg0: i32) -> (i32, i32) {
    %c0_i32 = arith.constant 0 : i32
    %c0_i32_0 = arith.constant 0 : i32
    return %arg0, %c0_i32 : i32, i32
  }
}

</mosaic_0001>

<llo_original>
// kernel: tpu_custom_call.1
$region0: #{tpu_custom_call.1}
  #allocation0 [shape = 'u32[]', space=smem, size = 0x4, offset = 0x4, fixed_abs, tag = 'smem constant byte address 0x4 - core index']
  #allocation1 [shape = 'u32[144,128]{1,0:T(1,128)}', space=vmem, size = 0x12000, scoped, tag = 'internal scratch']
  %s0 = inlined_call_operand.hbm [shape: f32[16,256], index: 0, kind: input, shape index: {}]
  %s1 = inlined_call_operand.hbm [shape: f32[128,128], index: 1, kind: input, shape index: {}]
  %s2 = inlined_call_operand.vmem [shape: f32[1,128], index: 2, kind: input, shape index: {}]
  %s3 = inlined_call_operand.hbm [shape: f32[128,128], index: 3, kind: input, shape index: {}]
  %s4 = inlined_call_operand.vmem [shape: f32[1,128], index: 4, kind: input, shape index: {}]
  %s5 = inlined_call_operand.vmem [shape: f32[1,128], index: 5, kind: input, shape index: {}]
  %s6 = inlined_call_operand.hbm [shape: f32[16,256], index: 6, kind: output, shape index: {0}]
  %s7 = inlined_call_operand.vmem [shape: f32[16,1], index: 7, kind: output, shape index: {1}]
  %8 = xla_tuple %s6, %s7
  %s9 = sld [smem:[#allocation0]]
  $region77: #{tpu_custom_call.1} parent=0
    _
  %s11 = ssub.s32 1, %s9
  %s12 = scalar_select 0, %s11, %s9
  $region1: #{tpu_custom_call.1} parent=0
    #allocation2 [shape = 'u8[16384]{0}', space=vmem, size = 0x4000, scoped, tag = 'input window, operand 0']
    #allocation3 [shape = 's32[2]{0}', space=sflag, size = 0x8, scoped, tag = 'scoped memory for tpu_custom_call.1']
    #allocation4 [shape = 's32[2]{0}', space=sflag, size = 0x8, scoped, tag = 'scoped memory for tpu_custom_call.1']
    #allocation5 [shape = 'u8[65536]{0}', space=vmem, size = 0x10000, scoped, tag = 'input window, operand 1, single buffered']
    #allocation6 [shape = 's32[1]{0}', space=sflag, size = 0x4, scoped, tag = 'scoped memory for tpu_custom_call.1']
    #allocation7 [shape = 'u8[65536]{0}', space=vmem, size = 0x10000, scoped, tag = 'input window, operand 3, single buffered']
    #allocation8 [shape = 'u8[16384]{0}', space=vmem, size = 0x4000, scoped, tag = 'output window, operand 0']
    %13 = vsyncpa [#allocation3], 0
    %s14 = scalar_lea.sflag [#allocation3], 1
    %15 = vsyncpa %s14, 0
    %16 = vsyncpa [#allocation6], 0
    %17 = vsyncpa [#allocation4], 0
    %s18 = scalar_lea.sflag [#allocation4], 1
    %19 = vsyncpa %s18, 0
    loop: start=0, step=1, limit=4
    $region2: #{tpu_custom_call.1} parent=1 // loop_pre_header
      _
    $region3: #{tpu_custom_call.1} parent=1 // loop_header
      %s21 = sphi 0, %s25
      %p22 = scmp.ge.s32.totalorder %s21, 4
      %s31 = sphi 0, %s33
      %s34 = sphi 0, %s31
      %s35 = sphi 0, %s34
      %s51 = sphi 0, %s35
      %s55 = sphi 0, %s55
      %s57 = sphi 0, %s55
      %s58 = sphi 0, %s57
      %s72 = sphi 0, %s58
      %s76 = sphi 0, %s76
      %s78 = sphi 0, %s76
      %s79 = sphi 0, %s78
      %s93 = sphi 0, %s79
      %s97 = sphi 0, %s97
      %s99 = sphi 0, %s97
      %s100 = sphi 0, %s99
      %s114 = sphi 0, %s100
      %s118 = sphi 0, %s118
      %s120 = sphi 0, %s118
      %s121 = sphi 0, %s120
      %s135 = sphi 0, %s121
      %s139 = sphi 0, %s139
      %s141 = sphi 0, %s139
      %s142 = sphi 0, %s141
      %s156 = sphi 0, %s142
      %s162 = sphi 0, %s164
      %s165 = sphi 0, %s162
      %s166 = sphi 0, %s165
      %s182 = sphi 0, %s166
      %s188 = sphi 0, %s190
      %s191 = sphi 0, %s188
      %s192 = sphi 0, %s191
      %s208 = sphi 0, %s192
    $region4: #{tpu_custom_call.1} parent=1 // loop_header_branch
      %24 = sbr.rel (%p22) target = $region8
    $region5: #{tpu_custom_call.1} parent=1 // loop_body
      %s26 = ssub.s32 %s21, 1
      %s27 = ssub.s32 %s21, 2
      %s28 = sadd.s32 %s21, 1
      %s29 = ssub.s32 %s21, %s28
      %p30 = scmp.eq.s32.totalorder %s29, 0
      %s32 = sadd.s32 %s31, 1
      %s33 = scalar_select %p30, %s31, %s32
      %p36 = pneg %p30
      %p37 = scmp.eq.s32.totalorder %s21, 1
      %p38 = por %p36, %p37
      %p39 = scmp.ne.s32.totalorder %s31, %s34
      %p40 = scmp.eq.s32.totalorder %s21, 0
      %p41 = por %p39, %p40
      %p42 = scmp.ne.s32.totalorder %s31, %s34
      %p43 = scmp.eq.s32.totalorder %s26, 1
      %p44 = por %p42, %p43
      %p45 = scmp.ne.s32.totalorder %s34, %s35
      %p46 = scmp.eq.s32.totalorder %s26, 0
      %p47 = por %p45, %p46
      %p48 = scmp.ne.s32.totalorder %s34, %s35
      %p49 = scmp.eq.s32.totalorder %s27, 1
      %p50 = por %p48, %p49
      %p52 = scmp.ne.s32.totalorder %s35, %s51
      %p53 = scmp.eq.s32.totalorder %s27, 0
      %p54 = por %p52, %p53
      %s56 = sadd.s32 %s55, 1
      %p59 = scmp.eq.s32.totalorder %s21, 1
      %p60 = scmp.ne.s32.totalorder %s55, %s57
      %p61 = scmp.eq.s32.totalorder %s21, 0
      %p62 = por %p60, %p61
      %p63 = scmp.ne.s32.totalorder %s55, %s57
      %p64 = scmp.eq.s32.totalorder %s26, 1
      %p65 = por %p63, %p64
      %p66 = scmp.ne.s32.totalorder %s57, %s58
      %p67 = scmp.eq.s32.totalorder %s26, 0
      %p68 = por %p66, %p67
      %p69 = scmp.ne.s32.totalorder %s57, %s58
      %p70 = scmp.eq.s32.totalorder %s27, 1
      %p71 = por %p69, %p70
      %p73 = scmp.ne.s32.totalorder %s58, %s72
      %p74 = scmp.eq.s32.totalorder %s27, 0
      %p75 = por %p73, %p74
      %s77 = sadd.s32 %s76, 1
      %p80 = scmp.eq.s32.totalorder %s21, 1
      %p81 = scmp.ne.s32.totalorder %s76, %s78
      %p82 = scmp.eq.s32.totalorder %s21, 0
      %p83 = por %p81, %p82
      %p84 = scmp.ne.s32.totalorder %s76, %s78
      %p85 = scmp.eq.s32.totalorder %s26, 1
      %p86 = por %p84, %p85
      %p87 = scmp.ne.s32.totalorder %s78, %s79
      %p88 = scmp.eq.s32.totalorder %s26, 0
      %p89 = por %p87, %p88
      %p90 = scmp.ne.s32.totalorder %s78, %s79
      %p91 = scmp.eq.s32.totalorder %s27, 1
      %p92 = por %p90, %p91
      %p94 = scmp.ne.s32.totalorder %s79, %s93
      %p95 = scmp.eq.s32.totalorder %s27, 0
      %p96 = por %p94, %p95
      %s98 = sadd.s32 %s97, 1
      %p101 = scmp.eq.s32.totalorder %s21, 1
      %p102 = scmp.ne.s32.totalorder %s97, %s99
      %p103 = scmp.eq.s32.totalorder %s21, 0
      %p104 = por %p102, %p103
      %p105 = scmp.ne.s32.totalorder %s97, %s99
      %p106 = scmp.eq.s32.totalorder %s26, 1
      %p107 = por %p105, %p106
      %p108 = scmp.ne.s32.totalorder %s99, %s100
      %p109 = scmp.eq.s32.totalorder %s26, 0
      %p110 = por %p108, %p109
      %p111 = scmp.ne.s32.totalorder %s99, %s100
      %p112 = scmp.eq.s32.totalorder %s27, 1
      %p113 = por %p111, %p112
      %p115 = scmp.ne.s32.totalorder %s100, %s114
      %p116 = scmp.eq.s32.totalorder %s27, 0
      %p117 = por %p115, %p116
      %s119 = sadd.s32 %s118, 1
      %p122 = scmp.eq.s32.totalorder %s21, 1
      %p123 = scmp.ne.s32.totalorder %s118, %s120
      %p124 = scmp.eq.s32.totalorder %s21, 0
      %p125 = por %p123, %p124
      %p126 = scmp.ne.s32.totalorder %s118, %s120
      %p127 = scmp.eq.s32.totalorder %s26, 1
      %p128 = por %p126, %p127
      %p129 = scmp.ne.s32.totalorder %s120, %s121
      %p130 = scmp.eq.s32.totalorder %s26, 0
      %p131 = por %p129, %p130
      %p132 = scmp.ne.s32.totalorder %s120, %s121
      %p133 = scmp.eq.s32.totalorder %s27, 1
      %p134 = por %p132, %p133
      %p136 = scmp.ne.s32.totalorder %s121, %s135
      %p137 = scmp.eq.s32.totalorder %s27, 0
      %p138 = por %p136, %p137
      %s140 = sadd.s32 %s139, 1
      %p143 = scmp.eq.s32.totalorder %s21, 1
      %p144 = scmp.ne.s32.totalorder %s139, %s141
      %p145 = scmp.eq.s32.totalorder %s21, 0
      %p146 = por %p144, %p145
      %p147 = scmp.ne.s32.totalorder %s139, %s141
      %p148 = scmp.eq.s32.totalorder %s26, 1
      %p149 = por %p147, %p148
      %p150 = scmp.ne.s32.totalorder %s141, %s142
      %p151 = scmp.eq.s32.totalorder %s26, 0
      %p152 = por %p150, %p151
      %p153 = scmp.ne.s32.totalorder %s141, %s142
      %p154 = scmp.eq.s32.totalorder %s27, 1
      %p155 = por %p153, %p154
      %p157 = scmp.ne.s32.totalorder %s142, %s156
      %p158 = scmp.eq.s32.totalorder %s27, 0
      %p159 = por %p157, %p158
      %s160 = ssub.s32 %s21, %s28
      %p161 = scmp.eq.s32.totalorder %s160, 0
      %s163 = sadd.s32 %s162, 1
      %s164 = scalar_select %p161, %s162, %s163
      %p167 = pneg %p161
      %p168 = scmp.eq.s32.totalorder %s21, 1
      %p169 = por %p167, %p168
      %p170 = scmp.ne.s32.totalorder %s162, %s165
      %p171 = scmp.eq.s32.totalorder %s21, 0
      %p172 = por %p170, %p171
      %p173 = scmp.ne.s32.totalorder %s162, %s165
      %p174 = scmp.eq.s32.totalorder %s26, 1
      %p175 = por %p173, %p174
      %p176 = scmp.ne.s32.totalorder %s165, %s166
      %p177 = scmp.eq.s32.totalorder %s26, 0
      %p178 = por %p176, %p177
      %p179 = scmp.ne.s32.totalorder %s165, %s166
      %p180 = scmp.eq.s32.totalorder %s27, 1
      %p181 = por %p179, %p180
      %p183 = scmp.ne.s32.totalorder %s166, %s182
      %p184 = scmp.eq.s32.totalorder %s27, 0
      %p185 = por %p183, %p184
      %s186 = ssub.s32 %s21, %s28
      %p187 = scmp.eq.s32.totalorder %s186, 0
      %s189 = sadd.s32 %s188, 1
      %s190 = scalar_select %p187, %s188, %s189
      %p193 = pneg %p187
      %p194 = scmp.eq.s32.totalorder %s21, 1
      %p195 = por %p193, %p194
      %p196 = scmp.ne.s32.totalorder %s188, %s191
      %p197 = scmp.eq.s32.totalorder %s21, 0
      %p198 = por %p196, %p197
      %p199 = scmp.ne.s32.totalorder %s188, %s191
      %p200 = scmp.eq.s32.totalorder %s26, 1
      %p201 = por %p199, %p200
      %p202 = scmp.ne.s32.totalorder %s191, %s192
      %p203 = scmp.eq.s32.totalorder %s26, 0
      %p204 = por %p202, %p203
      %p205 = scmp.ne.s32.totalorder %s191, %s192
      %p206 = scmp.eq.s32.totalorder %s27, 1
      %p207 = por %p205, %p206
      %p209 = scmp.ne.s32.totalorder %s192, %s208
      %p210 = scmp.eq.s32.totalorder %s27, 0
      %p211 = por %p209, %p210
      %p212 = scmp.le.s32.totalorder 1, %s21
      %p213 = scmp.lt.s32.totalorder %s21, 3
      %p214 = pnand %p212, %p213
      %p215 = pneg %p214
      // Predicated region
      $region9: #{tpu_custom_call.1} parent=5 // pred_check
        _
      $region10: #{tpu_custom_call.1} parent=5 // pred_check_branch
        %217 = sbr.rel (%p214) target = $region12
      $region11: #{tpu_custom_call.1} parent=5 // pred_region
        %s218 = ssub.s32 %s21, 1
        // Predicated region
        $region13: #{tpu_custom_call.1} parent=11 // pred_check
          %p219 = pneg %p68
        $region14: #{tpu_custom_call.1} parent=11 // pred_check_branch
          %221 = sbr.rel (%p219) target = $region16
        $region15: #{tpu_custom_call.1} parent=11 // pred_region
          %s223 = ssub.s32 2048, 2048
          %224 = vsyncadd [#allocation6], %s223
          %s225 = sshll.u32 [#allocation5], 4
          %s226 = int_to_ptr.vmem [resolvable:$true] %s225
          %231 = dma.hbm_to_vmem [thread:$0]  %s1, 2048, %s226, [#allocation6], 128, 128, 8
        $region16: #{tpu_custom_call.1} parent=11 // pred_fallthru
          _
        // Predicated region
        $region17: #{tpu_custom_call.1} parent=11 // pred_check
          %p232 = pneg %p89
        $region18: #{tpu_custom_call.1} parent=11 // pred_check_branch
          %234 = sbr.rel (%p232) target = $region20
        $region19: #{tpu_custom_call.1} parent=11 // pred_region
          _
        $region20: #{tpu_custom_call.1} parent=11 // pred_fallthru
          _
        // Predicated region
        $region21: #{tpu_custom_call.1} parent=11 // pred_check
          %p235 = pneg %p110
        $region22: #{tpu_custom_call.1} parent=11 // pred_check_branch
          %237 = sbr.rel (%p235) target = $region24
        $region23: #{tpu_custom_call.1} parent=11 // pred_region
          %s239 = ssub.s32 2048, 2048
          %240 = vsyncadd [#allocation6], %s239
          %s241 = sshll.u32 [#allocation7], 4
          %s242 = int_to_ptr.vmem [resolvable:$true] %s241
          %247 = dma.hbm_to_vmem [thread:$0]  %s3, 2048, %s242, [#allocation6], 128, 128, 8
        $region24: #{tpu_custom_call.1} parent=11 // pred_fallthru
          _
        // Predicated region
        $region25: #{tpu_custom_call.1} parent=11 // pred_check
          %p248 = pneg %p131
        $region26: #{tpu_custom_call.1} parent=11 // pred_check_branch
          %250 = sbr.rel (%p248) target = $region28
        $region27: #{tpu_custom_call.1} parent=11 // pred_region
          _
        $region28: #{tpu_custom_call.1} parent=11 // pred_fallthru
          _
        // Predicated region
        $region29: #{tpu_custom_call.1} parent=11 // pred_check
          %p251 = pneg %p152
        $region30: #{tpu_custom_call.1} parent=11 // pred_check_branch
          %253 = sbr.rel (%p251) target = $region32
        $region31: #{tpu_custom_call.1} parent=11 // pred_region
          _
        $region32: #{tpu_custom_call.1} parent=11 // pred_fallthru
          _
      $region12: #{tpu_custom_call.1} parent=5 // pred_fallthru
        _
      %p254 = scmp.lt.s32.totalorder %s21, 2
      // Predicated region
      $region33: #{tpu_custom_call.1} parent=5 // pred_check
        %p255 = pneg %p254
      $region34: #{tpu_custom_call.1} parent=5 // pred_check_branch
        %257 = sbr.rel (%p255) target = $region36
      $region35: #{tpu_custom_call.1} parent=5 // pred_region
        // Predicated region
        $region37: #{tpu_custom_call.1} parent=35 // pred_check
          %p258 = pneg %p41
        $region38: #{tpu_custom_call.1} parent=35 // pred_check_branch
          %260 = sbr.rel (%p258) target = $region40
        $region39: #{tpu_custom_call.1} parent=35 // pred_region
          %s261 = sand.u32 %s31, 1
          %s262 = scalar_lea.sflag [#allocation3], %s261
          %s263 = sand.u32 %s31, 1
          %s264 = smul.addr %s263, 16
          %s265 = scalar_lea.vmem [#allocation2], %s264
          %s267 = ssub.s32 256, 256
          %268 = vsyncadd %s262, %s267
          %s269 = smul.addr %s21, 2
          %s270 = smul.addr %s269, 128
          %s271 = scalar_lea.hbm %s0, %s270
          %s273 = sshll.u32 %s265, 4
          %s274 = int_to_ptr.vmem [resolvable:$true] %s273
          %276 = dma.hbm_to_vmem [thread:$0]  %s271, 256, %s274, %s262
        $region40: #{tpu_custom_call.1} parent=35 // pred_fallthru
          _
      $region36: #{tpu_custom_call.1} parent=5 // pred_fallthru
        _
      %p277 = scmp.le.s32.totalorder 1, %s21
      %p278 = scmp.lt.s32.totalorder %s21, 3
      %p279 = pnand %p277, %p278
      %p280 = pneg %p279
      // Predicated region
      $region41: #{tpu_custom_call.1} parent=5 // pred_check
        _
      $region42: #{tpu_custom_call.1} parent=5 // pred_check_branch
        %282 = sbr.rel (%p279) target = $region44
      $region43: #{tpu_custom_call.1} parent=5 // pred_region
        %s283 = ssub.s32 %s21, 1
        %s284 = sand.u32 %s34, 1
        %s285 = scalar_lea.sflag [#allocation3], %s284
        %s286 = sand.u32 %s34, 1
        %s287 = smul.addr %s286, 16
        %s288 = scalar_lea.vmem [#allocation2], %s287
        // Predicated region
        $region45: #{tpu_custom_call.1} parent=43 // pred_check
          %p289 = pneg %p47
        $region46: #{tpu_custom_call.1} parent=43 // pred_check_branch
          %291 = sbr.rel (%p289) target = $region48
        $region47: #{tpu_custom_call.1} parent=43 // pred_region
          %292 = dma.done %s285, 256
        $region48: #{tpu_custom_call.1} parent=43 // pred_fallthru
          _
        // Predicated region
        $region49: #{tpu_custom_call.1} parent=43 // pred_check
          %p293 = pneg %p68
        $region50: #{tpu_custom_call.1} parent=43 // pred_check_branch
          %295 = sbr.rel (%p293) target = $region52
        $region51: #{tpu_custom_call.1} parent=43 // pred_region
          %296 = dma.done [#allocation6], 2048
        $region52: #{tpu_custom_call.1} parent=43 // pred_fallthru
          _
        // Predicated region
        $region53: #{tpu_custom_call.1} parent=43 // pred_check
          %p297 = pneg %p110
        $region54: #{tpu_custom_call.1} parent=43 // pred_check_branch
          %299 = sbr.rel (%p297) target = $region56
        $region55: #{tpu_custom_call.1} parent=43 // pred_region
          %300 = dma.done [#allocation6], 2048
        $region56: #{tpu_custom_call.1} parent=43 // pred_fallthru
          _
        %s301 = sand.u32 %s34, 1
        %s302 = scalar_lea.sflag [#allocation3], %s301
        %s303 = sand.u32 %s34, 1
        %s304 = smul.addr %s303, 16
        %s305 = scalar_lea.vmem [#allocation2], %s304
        %p306 = pneg %p47
        %p307 = pneg %p44
        %p308 = pneg %p68
        %p309 = pneg %p65
        %p310 = pneg %p89
        %p311 = pneg %p86
        %p312 = pneg %p110
        %p313 = pneg %p107
        %p314 = pneg %p131
        %p315 = pneg %p128
        %p316 = pneg %p152
        %p317 = pneg %p149
        %p318 = pneg %p178
        %p319 = pneg %p175
        %s320 = sand.u32 %s165, 1
        %s321 = scalar_lea.sflag [#allocation4], %s320
        %s322 = sand.u32 %s165, 1
        %s323 = smul.addr %s322, 16
        %s324 = scalar_lea.vmem [#allocation8], %s323
        %p325 = pneg %p204
        %p326 = pneg %p201
        %p327 = scmp.lt.s32.totalorder %s26, 1
        %s328 = scalar_select %p327, %s26, 1
        %s329 = smul.addr %s328, 8
        %s330 = scalar_lea.vmem %s7, %s329
        %p331 = scmp.lt.s32.totalorder %s26, 1
        %s332 = scalar_select %p331, %s26, 1
        %s333 = smul.addr %s332, 8
        %s334 = scalar_lea.vmem %s7, %s333
        %v335 = vld [vmem:[%s288] sm:$0xff]
        %v336 = vld [vmem:[%s288 + $0x8] sm:$0xff]
        %v337 = vld [vmem:[#allocation5] sm:$0xff]
        %v338 = vld [vmem:[#allocation5 + $0x8] sm:$0xff]
        %v339 = vld [vmem:[#allocation5 + $0x10] sm:$0xff]
        %v340 = vld [vmem:[#allocation5 + $0x18] sm:$0xff]
        %v341 = vld [vmem:[#allocation5 + $0x20] sm:$0xff]
        %v342 = vld [vmem:[#allocation5 + $0x28] sm:$0xff]
        %v343 = vld [vmem:[#allocation5 + $0x30] sm:$0xff]
        %v344 = vld [vmem:[#allocation5 + $0x38] sm:$0xff]
        %v345 = vld [vmem:[#allocation5 + $0x40] sm:$0xff]
        %v346 = vld [vmem:[#allocation5 + $0x48] sm:$0xff]
        %v347 = vld [vmem:[#allocation5 + $0x50] sm:$0xff]
        %v348 = vld [vmem:[#allocation5 + $0x58] sm:$0xff]
        %v349 = vld [vmem:[#allocation5 + $0x60] sm:$0xff]
        %v350 = vld [vmem:[#allocation5 + $0x68] sm:$0xff]
        %v351 = vld [vmem:[#allocation5 + $0x70] sm:$0xff]
        %v352 = vld [vmem:[#allocation5 + $0x78] sm:$0xff]
        %v353 = vld [vmem:[%s2] sm:$0x1]
        %v355 = vlaneseq
        %v356 = vshrl.u32 %v355, 7
        %v357 = vsub.s32 0, %v356
        %v358 = vrot.slane %v353, %v357
        %360 = vmatprep.subr.mxu0 0.0
        %361 = vmatpush1.msra.mxu0 %v337
        %362 = vmatprep.subr.mxu0 0.0
        %363 = vmatpush1.msra.mxu0 %v338
        %364 = vmatprep.subr.mxu0 0.0
        %365 = vmatpush1.msra.mxu0 %v339
        %366 = vmatprep.subr.mxu0 0.0
        %367 = vmatpush1.msra.mxu0 %v340
        %368 = vmatprep.subr.mxu0 0.0
        %369 = vmatpush1.msra.mxu0 %v341
        %370 = vmatprep.subr.mxu0 0.0
        %371 = vmatpush1.msra.mxu0 %v342
        %372 = vmatprep.subr.mxu0 0.0
        %373 = vmatpush1.msra.mxu0 %v343
        %374 = vmatprep.subr.mxu0 0.0
        %375 = vmatpush1.msra.mxu0 %v344
        %376 = vmatprep.subr.mxu0 0.0
        %377 = vmatpush1.msra.mxu0 %v345
        %378 = vmatprep.subr.mxu0 0.0
        %379 = vmatpush1.msra.mxu0 %v346
        %380 = vmatprep.subr.mxu0 0.0
        %381 = vmatpush1.msra.mxu0 %v347
        %382 = vmatprep.subr.mxu0 0.0
        %383 = vmatpush1.msra.mxu0 %v348
        %384 = vmatprep.subr.mxu0 0.0
        %385 = vmatpush1.msra.mxu0 %v349
        %386 = vmatprep.subr.mxu0 0.0
        %387 = vmatpush1.msra.mxu0 %v350
        %388 = vmatprep.subr.mxu0 0.0
        %389 = vmatpush1.msra.mxu0 %v351
        %390 = vmatprep.subr.mxu0 0.0
        %391 = vmatpush1.msra.mxu0 %v352
        %392 = vmatprep.subr.mxu0 0.0
        %393 = vmatpush1.msra.mxu0 0.0
        %394 = vmatprep.subr.mxu0 0.0
        %395 = vmatpush1.msra.mxu0 0.0
        %396 = vmatprep.subr.mxu0 0.0
        %397 = vmatpush1.msra.mxu0 0.0
        %398 = vmatprep.subr.mxu0 0.0
        %399 = vmatpush1.msra.mxu0 0.0
        %400 = vmatprep.subr.mxu0 0.0
        %401 = vmatpush1.msra.mxu0 0.0
        %402 = vmatprep.subr.mxu0 0.0
        %403 = vmatpush1.msra.mxu0 0.0
        %404 = vmatprep.subr.mxu0 0.0
        %405 = vmatpush1.msra.mxu0 0.0
        %406 = vmatprep.subr.mxu0 0.0
        %407 = vmatpush1.msra.mxu0 0.0
        %408 = vmatprep.subr.mxu0 0.0
        %409 = vmatpush1.msra.mxu0 0.0
        %410 = vmatprep.subr.mxu0 0.0
        %411 = vmatpush1.msra.mxu0 0.0
        %412 = vmatprep.subr.mxu0 0.0
        %413 = vmatpush1.msra.mxu0 0.0
        %414 = vmatprep.subr.mxu0 0.0
        %415 = vmatpush1.msra.mxu0 0.0
        %416 = vmatprep.subr.mxu0 0.0
        %417 = vmatpush1.msra.mxu0 0.0
        %418 = vmatprep.subr.mxu0 0.0
        %419 = vmatpush1.msra.mxu0 0.0
        %420 = vmatprep.subr.mxu0 0.0
        %421 = vmatpush1.msra.mxu0 0.0
        %422 = vmatprep.subr.mxu0 0.0
        %423 = vmatpush1.msra.mxu0 0.0
        %424 = vmatprep.mubr.f32.mxu0 0.0
        %425 = vmatmul.mubr.f32.gmra.mrb[0].mxu0 %v335
        %v426 = vpop.f32.mrb[0].mxu0
        %v427 = vadd.f32 %v358, %v426
        %v428 = vpop.f32.mrb[0].mxu0
        %429 = vdwg.mxu0
        %v430 = vld [vmem:[#allocation7] sm:$0xff]
        %v431 = vld [vmem:[#allocation7 + $0x8] sm:$0xff]
        %v432 = vld [vmem:[#allocation7 + $0x10] sm:$0xff]
        %v433 = vld [vmem:[#allocation7 + $0x18] sm:$0xff]
        %v434 = vld [vmem:[#allocation7 + $0x20] sm:$0xff]
        %v435 = vld [vmem:[#allocation7 + $0x28] sm:$0xff]
        %v436 = vld [vmem:[#allocation7 + $0x30] sm:$0xff]
        %v437 = vld [vmem:[#allocation7 + $0x38] sm:$0xff]
        %v438 = vld [vmem:[#allocation7 + $0x40] sm:$0xff]
        %v439 = vld [vmem:[#allocation7 + $0x48] sm:$0xff]
        %v440 = vld [vmem:[#allocation7 + $0x50] sm:$0xff]
        %v441 = vld [vmem:[#allocation7 + $0x58] sm:$0xff]
        %v442 = vld [vmem:[#allocation7 + $0x60] sm:$0xff]
        %v443 = vld [vmem:[#allocation7 + $0x68] sm:$0xff]
        %v444 = vld [vmem:[#allocation7 + $0x70] sm:$0xff]
        %v445 = vld [vmem:[#allocation7 + $0x78] sm:$0xff]
        %v446 = vld [vmem:[%s4] sm:$0x1]
        %v448 = vlaneseq
        %v449 = vshrl.u32 %v448, 7
        %v450 = vsub.s32 0, %v449
        %v451 = vrot.slane %v446, %v450
        %453 = vmatprep.subr.mxu0 0.0
        %454 = vmatpush1.msra.mxu0 %v430
        %455 = vmatprep.subr.mxu0 0.0
        %456 = vmatpush1.msra.mxu0 %v431
        %457 = vmatprep.subr.mxu0 0.0
        %458 = vmatpush1.msra.mxu0 %v432
        %459 = vmatprep.subr.mxu0 0.0
        %460 = vmatpush1.msra.mxu0 %v433
        %461 = vmatprep.subr.mxu0 0.0
        %462 = vmatpush1.msra.mxu0 %v434
        %463 = vmatprep.subr.mxu0 0.0
        %464 = vmatpush1.msra.mxu0 %v435
        %465 = vmatprep.subr.mxu0 0.0
        %466 = vmatpush1.msra.mxu0 %v436
        %467 = vmatprep.subr.mxu0 0.0
        %468 = vmatpush1.msra.mxu0 %v437
        %469 = vmatprep.subr.mxu0 0.0
        %470 = vmatpush1.msra.mxu0 %v438
        %471 = vmatprep.subr.mxu0 0.0
        %472 = vmatpush1.msra.mxu0 %v439
        %473 = vmatprep.subr.mxu0 0.0
        %474 = vmatpush1.msra.mxu0 %v440
        %475 = vmatprep.subr.mxu0 0.0
        %476 = vmatpush1.msra.mxu0 %v441
        %477 = vmatprep.subr.mxu0 0.0
        %478 = vmatpush1.msra.mxu0 %v442
        %479 = vmatprep.subr.mxu0 0.0
        %480 = vmatpush1.msra.mxu0 %v443
        %481 = vmatprep.subr.mxu0 0.0
        %482 = vmatpush1.msra.mxu0 %v444
        %483 = vmatprep.subr.mxu0 0.0
        %484 = vmatpush1.msra.mxu0 %v445
        %485 = vmatprep.subr.mxu0 0.0
        %486 = vmatpush1.msra.mxu0 0.0
        %487 = vmatprep.subr.mxu0 0.0
        %488 = vmatpush1.msra.mxu0 0.0
        %489 = vmatprep.subr.mxu0 0.0
        %490 = vmatpush1.msra.mxu0 0.0
        %491 = vmatprep.subr.mxu0 0.0
        %492 = vmatpush1.msra.mxu0 0.0
        %493 = vmatprep.subr.mxu0 0.0
        %494 = vmatpush1.msra.mxu0 0.0
        %495 = vmatprep.subr.mxu0 0.0
        %496 = vmatpush1.msra.mxu0 0.0
        %497 = vmatprep.subr.mxu0 0.0
        %498 = vmatpush1.msra.mxu0 0.0
        %499 = vmatprep.subr.mxu0 0.0
        %500 = vmatpush1.msra.mxu0 0.0
        %501 = vmatprep.subr.mxu0 0.0
        %502 = vmatpush1.msra.mxu0 0.0
        %503 = vmatprep.subr.mxu0 0.0
        %504 = vmatpush1.msra.mxu0 0.0
        %505 = vmatprep.subr.mxu0 0.0
        %506 = vmatpush1.msra.mxu0 0.0
        %507 = vmatprep.subr.mxu0 0.0
        %508 = vmatpush1.msra.mxu0 0.0
        %509 = vmatprep.subr.mxu0 0.0
        %510 = vmatpush1.msra.mxu0 0.0
        %511 = vmatprep.subr.mxu0 0.0
        %512 = vmatpush1.msra.mxu0 0.0
        %513 = vmatprep.subr.mxu0 0.0
        %514 = vmatpush1.msra.mxu0 0.0
        %515 = vmatprep.subr.mxu0 0.0
        %516 = vmatpush1.msra.mxu0 0.0
        %517 = vmatprep.mubr.f32.mxu0 0.0
        %518 = vmatmul.mubr.f32.gmra.mrb[0].mxu0 %v335
        %v519 = vpop.f32.mrb[0].mxu0
        %v520 = vadd.f32 %v451, %v519
        %v521 = vpop.f32.mrb[0].mxu0
        %522 = vdwg.mxu0
        %v523 = vld [vmem:[%s5] sm:$0x1]
        %v524 = vmul.f32 %v523, 1.442695
        %v525 = vpow.pop %v524
        %v527 = vlaneseq
        %v528 = vshrl.u32 %v527, 7
        %v529 = vsub.s32 0, %v528
        %v530 = vrot.slane %v525, %v529
        %v532 = vrcp.pop %v530
        %v533 = vmul.f32 %v427, %v532
        %v534 = vtanh.pop %v533
        %v535 = vmul.f32 %v534, %v530
        %v536 = vmul.f32 %v535, 1.442695
        %v537 = vpow.pop %v536
        %v538 = vmul.f32 %v336, %v537
        %v539 = vadd.f32 %v538, %v520
        %540 = vst [vmem:[%s324] sm:$0xff] %v335
        %541 = vst [vmem:[%s324 + $0x8] sm:$0xff] %v539
        %542 = vadd.xlane.f32.xlu0 %v535
        %v543 = vpop.xlane.xlu0 %542
        %vm544 = vcmask 7168
        %545 = vst.msk [vmem:[%s334] sm:$0xff] %vm544, %v543
        %s546 = sand.u32 %s165, 1
        %s547 = scalar_lea.sflag [#allocation4], %s546
        %s548 = sand.u32 %s165, 1
        %s549 = smul.addr %s548, 16
        %s550 = scalar_lea.vmem [#allocation8], %s549
        %p551 = scmp.lt.s32.totalorder %s26, 1
        %s552 = scalar_select %p551, %s26, 1
        %s553 = smul.addr %s552, 8
        %s554 = scalar_lea.vmem %s7, %s553
        // Predicated region
        $region57: #{tpu_custom_call.1} parent=43 // pred_check
          %p555 = pneg %p175
        $region58: #{tpu_custom_call.1} parent=43 // pred_check_branch
          %557 = sbr.rel (%p555) target = $region60
        $region59: #{tpu_custom_call.1} parent=43 // pred_region
          %s559 = ssub.s32 256, 256
          %560 = vsyncadd %s547, %s559
          %s561 = smul.addr %s26, 2
          %s562 = smul.addr %s561, 128
          %s563 = scalar_lea.hbm %s6, %s562
          %s565 = sshll.u32 %s550, 4
          %s566 = int_to_ptr.vmem [resolvable:$true] %s565
          %568 = dma.vmem_to_hbm [thread:$0]  %s566, 256, %s563, %s547
        $region60: #{tpu_custom_call.1} parent=43 // pred_fallthru
          _
        // Predicated region
        $region61: #{tpu_custom_call.1} parent=43 // pred_check
          %p569 = pneg %p201
        $region62: #{tpu_custom_call.1} parent=43 // pred_check_branch
          %571 = sbr.rel (%p569) target = $region64
        $region63: #{tpu_custom_call.1} parent=43 // pred_region
          _
        $region64: #{tpu_custom_call.1} parent=43 // pred_fallthru
          _
      $region44: #{tpu_custom_call.1} parent=5 // pred_fallthru
        _
      %p572 = scmp.le.s32.totalorder 2, %s21
      // Predicated region
      $region65: #{tpu_custom_call.1} parent=5 // pred_check
        %p573 = pneg %p572
      $region66: #{tpu_custom_call.1} parent=5 // pred_check_branch
        %575 = sbr.rel (%p573) target = $region68
      $region67: #{tpu_custom_call.1} parent=5 // pred_region
        %s576 = ssub.s32 %s21, 2
        // Predicated region
        $region69: #{tpu_custom_call.1} parent=67 // pred_check
          %p577 = pneg %p181
        $region70: #{tpu_custom_call.1} parent=67 // pred_check_branch
          %579 = sbr.rel (%p577) target = $region72
        $region71: #{tpu_custom_call.1} parent=67 // pred_region
          %s580 = sand.u32 %s166, 1
          %s581 = scalar_lea.sflag [#allocation4], %s580
          %s582 = sand.u32 %s166, 1
          %s583 = smul.addr %s582, 16
          %s584 = scalar_lea.vmem [#allocation8], %s583
          %585 = dma.done %s581, 256
        $region72: #{tpu_custom_call.1} parent=67 // pred_fallthru
          _
        // Predicated region
        $region73: #{tpu_custom_call.1} parent=67 // pred_check
          %p586 = pneg %p207
        $region74: #{tpu_custom_call.1} parent=67 // pred_check_branch
          %588 = sbr.rel (%p586) target = $region76
        $region75: #{tpu_custom_call.1} parent=67 // pred_region
          %p589 = scmp.lt.s32.totalorder %s27, 1
          %s590 = scalar_select %p589, %s27, 1
          %s591 = smul.addr %s590, 8
          %s592 = scalar_lea.vmem %s7, %s591
        $region76: #{tpu_custom_call.1} parent=67 // pred_fallthru
          _
      $region68: #{tpu_custom_call.1} parent=5 // pred_fallthru
        _
    $region6: #{tpu_custom_call.1} parent=1 // loop_footer
      %s25 = sadd.s32 1, %s21
    $region7: #{tpu_custom_call.1} parent=1 // loop_footer_branch
      %20 = sbr.rel target = $region3
    $region8: #{tpu_custom_call.1} parent=1 // loop_exit
      _
    %593 = vsyncpa [#allocation3], 1
    %s594 = scalar_lea.sflag [#allocation3], 1
    %595 = vsyncpa %s594, 1
    %596 = vsyncpa [#allocation6], 1
    %597 = vsyncpa [#allocation4], 1
    %s598 = scalar_lea.sflag [#allocation4], 1
    %599 = vsyncpa %s598, 1

</llo_original>
